<compile_context>
chip_gen: v7x
topology: tpu7x:2x2x1
jax: 0.10.0
libtpu: 0.0.40
codegen_flags: <defaults>
</compile_context>

<pallas_src>
import jax
import jax.numpy as jnp
from jax.experimental import pallas as pl
from jax.experimental.pallas import tpu as pltpu


LANE = 128
X_SLAB_BYTES = 4 * 1024 * 1024      # per-buffer cap for the streamed x tile
MIN_GRID_STEPS = 4                  # >=2 steps per TC even on 2-TC parts (v7x)


def _round_up(n, m):
    return ((n + m - 1) // m) * m


def _vmem_capacity_bytes():
    """Per-core VMEM capacity; 128 MiB fallback (v5e/v6e) — the explicit
    vmem_limit_bytes derived from the real footprint is the safety net."""
    try:
        return int(pltpu.get_tpu_info().vmem_capacity_bytes)
    except Exception:
        return 128 * 1024 * 1024


def _per_row_vmem_bytes(S, D, d_out_p, hid_p, c_p):
    """Bytes of VMEM needed per batch row (f32): double-buffered streamed operands
    (x, mask, out) plus the in-kernel temporaries (x*q and attn*x products,
    scores/exp/attn rows, pooled vector, MLP activations)."""
    streamed = 2 * (S * D + S + c_p)                     # double-buffered
    temps = 2 * S * D + 3 * S + D + d_out_p + hid_p + c_p
    return 4 * (streamed + temps)


def _choose_batch_tile(B, S, D, d_out_p, hid_p, c_p, weight_bytes, vmem_cap):
    if B <= 8:
        return B
    per_row = _per_row_vmem_bytes(S, D, d_out_p, hid_p, c_p)
    # Stay well inside VMEM: half the capacity minus the (single-buffered) weights.
    budget = max(vmem_cap // 2 - weight_bytes, 8 * per_row)
    tb = budget // per_row
    # Cap the streamed x slab at ~4 MiB per buffer (HBM roofline saturates there).
    tb = min(tb, max(1, X_SLAB_BYTES // (4 * S * D)))
    # Guarantee >= MIN_GRID_STEPS grid steps so double-buffering has work to
    # overlap and the "parallel" batch axis can shard across 2 TCs on v7x.
    tb = min(tb, pl.cdiv(B, MIN_GRID_STEPS))
    tb = max(8, (tb // 8) * 8)                           # sublane-aligned
    tb = min(tb, _round_up(B, 8))
    return int(tb)


def mhap_mlp_kernel(x_ref, mask_ref, q_ref, wp_ref, bp_ref,
                    w1_ref, b1_ref, w2_ref, b2_ref, out_ref):
    x = x_ref[...]                                   # (TB, S, D) f32
    mask = mask_ref[...]                             # (TB, S)   f32
    q = q_ref[...]                                   # (1, D)

    tb, s_len, d = x.shape
    inv_sqrt_d = jnp.float32(1.0 / (d ** 0.5))

    # ---- attention scores on the VPU/XLU: dense (TB, S) -------------------------
    # lane-axis (D) reduce; q broadcast implicitly in the multiply (no broadcast_to)
    scores = jnp.sum(x * q.reshape(1, 1, d), axis=-1) * inv_sqrt_d      # (TB, S)
    scores = jnp.where(mask > 0.5, scores, jnp.float32(-1e9))

    # ---- masked softmax over the sequence, dense 2D layout -----------------------
    m = jnp.max(scores, axis=-1, keepdims=True)                         # (TB, 1)
    e = jnp.exp(scores - m)                                             # (TB, S)
    denom = jnp.sum(e, axis=-1, keepdims=True)                          # (TB, 1)
    attn = e * pl.reciprocal(denom, approx=True)                        # EUP vrcp

    # ---- attention pooling: sublane-axis (S) reduce ------------------------------
    pooled = jnp.sum(attn[:, :, None] * x, axis=1)                      # (TB, D)

    # ---- projection + MLP head (lane-padded widths, MXU) -------------------------
    proj = jnp.dot(pooled, wp_ref[...],
                   preferred_element_type=jnp.float32) + bp_ref[...]
    h = jnp.maximum(
        jnp.dot(proj, w1_ref[...], preferred_element_type=jnp.float32) + b1_ref[...],
        jnp.float32(0.0))
    logits = jnp.dot(h, w2_ref[...],
                     preferred_element_type=jnp.float32) + b2_ref[...]

    out_ref[...] = logits.astype(out_ref.dtype)


def mhap_mlp_forward(x, mask, params):
    """x: (B, S, D) f32, mask: (B, S) f32 (1 keep / 0 drop). Returns logits (B, C)."""
    B, S, D = x.shape
    d_out = params["wp"].shape[1]
    hid = params["w1"].shape[1]
    C = params["w2"].shape[1]

    # Lane-pad the small head dims (layout plumbing only; zero padding is exact).
    d_out_p = _round_up(d_out, LANE)
    hid_p = _round_up(hid, LANE)
    c_p = _round_up(C, LANE)

    q = params["q"]                                                       # (1, D)
    wp = jnp.pad(params["wp"], ((0, 0), (0, d_out_p - d_out)))            # (D, d_out_p)
    bp = jnp.pad(params["bp"], ((0, 0), (0, d_out_p - d_out)))            # (1, d_out_p)
    w1 = jnp.pad(params["w1"], ((0, d_out_p - d_out), (0, hid_p - hid)))  # (d_out_p, hid_p)
    b1 = jnp.pad(params["b1"], ((0, 0), (0, hid_p - hid)))                # (1, hid_p)
    w2 = jnp.pad(params["w2"], ((0, hid_p - hid), (0, c_p - C)))          # (hid_p, c_p)
    b2 = jnp.pad(params["b2"], ((0, 0), (0, c_p - C)))                    # (1, c_p)

    weights = (q, wp, bp, w1, b1, w2, b2)
    weight_bytes = 4 * sum(int(w.size) for w in weights)

    vmem_cap = _vmem_capacity_bytes()
    TB = _choose_batch_tile(B, S, D, d_out_p, hid_p, c_p, weight_bytes, vmem_cap)
    grid = (pl.cdiv(B, TB),)

    const_map = lambda b: (0, 0)          # weights stay resident across grid steps

    in_specs = [
        pl.BlockSpec((TB, S, D), lambda b: (b, 0, 0)),   # x tiles stream
        pl.BlockSpec((TB, S), lambda b: (b, 0)),         # mask tiles stream
    ] + [
        # constant index_map -> single-buffer: no point double-buffering weights
        pl.BlockSpec(w.shape, const_map, pipeline_mode=pl.Buffered(1))
        for w in weights
    ]
    out_specs = pl.BlockSpec((TB, c_p), lambda b: (b, 0))

    # VMEM budget: everything that is actually live per grid step.
    per_row = _per_row_vmem_bytes(S, D, d_out_p, hid_p, c_p)
    total_bytes = TB * per_row + weight_bytes
    vmem_limit = int(min(max(32 * 1024 * 1024, 2 * total_bytes),
                         (9 * vmem_cap) // 10))

    flops = int(2 * B * S * D            # scores (mul + lane reduce)
                + 2 * B * S * D          # pooling (mul + sublane reduce)
                + 2 * B * D * d_out_p
                + 2 * B * d_out_p * hid_p
                + 2 * B * hid_p * c_p)
    bytes_accessed = int(4 * (B * S * D + B * S + B * c_p) + weight_bytes)
    cost = pl.CostEstimate(flops=flops,
                           transcendentals=int(B * S + B),
                           bytes_accessed=bytes_accessed)

    logits_padded = pl.pallas_call(
        mhap_mlp_kernel,
        out_shape=jax.ShapeDtypeStruct((B, c_p), jnp.float32),
        grid=grid,
        in_specs=in_specs,
        out_specs=out_specs,
        compiler_params=pltpu.CompilerParams(
            dimension_semantics=("parallel",),   # shard batch tiles across TCs (v7x)
            vmem_limit_bytes=vmem_limit),
        cost_estimate=cost,
    )(x, mask, *weights)

    return logits_padded[:, :C]


def mhap_mlp_reference(x, mask, params):
    """Pure-JAX reference of the same forward (for verification)."""
    D = x.shape[-1]
    scores = jnp.einsum("bsd,od->bs", x, params["q"]) / jnp.sqrt(jnp.float32(D))
    scores = jnp.where(mask > 0.5, scores, -1e9)
    attn = jax.nn.softmax(scores, axis=-1)
    pooled = jnp.einsum("bs,bsd->bd", attn, x)
    proj = pooled @ params["wp"] + params["bp"]
    h = jax.nn.relu(proj @ params["w1"] + params["b1"])
    return h @ params["w2"] + params["b2"]


def init_params(key, input_embed_dim, output_embed_dim, mlp_hidden_dim, num_classes):
    ks = jax.random.split(key, 4)
    scale = 0.02
    return {
        "q":  scale * jax.random.normal(ks[0], (1, input_embed_dim), jnp.float32),
        "wp": scale * jax.random.normal(ks[1], (input_embed_dim, output_embed_dim), jnp.float32),
        "bp": jnp.zeros((1, output_embed_dim), jnp.float32),
        "w1": scale * jax.random.normal(ks[2], (output_embed_dim, mlp_hidden_dim), jnp.float32),
        "b1": jnp.zeros((1, mlp_hidden_dim), jnp.float32),
        "w2": scale * jax.random.normal(ks[3], (mlp_hidden_dim, num_classes), jnp.float32),
        "b2": jnp.zeros((1, num_classes), jnp.float32),
    }


def _run_case(B, S, D, d_out, hid, C, key):
    k_x, k_m, k_p = jax.random.split(key, 3)
    x = jax.random.uniform(k_x, (B, S, D), jnp.float32)
    # deterministic mask with some dropped tokens; keep token 0 so rows are non-empty
    mask = (jax.random.uniform(k_m, (B, S)) > 0.25).astype(jnp.float32)
    mask = mask.at[:, 0].set(1.0)
    params = init_params(k_p, D, d_out, hid, C)

    logits = jax.block_until_ready(mhap_mlp_forward(x, mask, params))
    ref = mhap_mlp_reference(x, mask, params)
    assert logits.shape == (B, C)
    # tolerance loosened slightly for the EUP approximate reciprocal in the softmax
    assert jnp.allclose(logits, ref, atol=2e-3, rtol=2e-3), "Pallas output != reference"


if __name__ == "__main__":
    # Small shapes consistent with the module's forward:
    # embeddings (B, S, input_embed_dim) -> logits (B, num_classes).
    key = jax.random.PRNGKey(0)

    # Tiny single-tile case (exercises the masking / softmax path).
    _run_case(B=2, S=8, D=32, d_out=16, hid=32, C=5, key=jax.random.fold_in(key, 0))

    # Medium case (exercises batch tiling with multiple grid steps).
    _run_case(B=64, S=36, D=256, d_out=128, hid=64, C=5, key=jax.random.fold_in(key, 1))

    # TODO(synk): BCEWithLogitsLoss (training-only labels/loss path) is left out of the kernel.
    print("KERNEL_OK")
</pallas_src>

<mosaic_0001>
module attributes {stable_mosaic.version = 11 : i64} {
  func.func @mhap_mlp_kernel(%arg0: i32, %arg1: memref<2x8x32xf32, #tpu.memory_space<vmem>>, %arg2: memref<2x8xf32, #tpu.memory_space<vmem>>, %arg3: memref<1x32xf32, #tpu.memory_space<vmem>>, %arg4: memref<32x128xf32, #tpu.memory_space<vmem>>, %arg5: memref<1x128xf32, #tpu.memory_space<vmem>>, %arg6: memref<128x128xf32, #tpu.memory_space<vmem>>, %arg7: memref<1x128xf32, #tpu.memory_space<vmem>>, %arg8: memref<128x128xf32, #tpu.memory_space<vmem>>, %arg9: memref<1x128xf32, #tpu.memory_space<vmem>>, %arg10: memref<2x128xf32, #tpu.memory_space<vmem>>) attributes {dimension_semantics = [#tpu.dimension_semantics<parallel>], iteration_bounds = array<i64: 1>, scalar_prefetch = 0 : i64, scratch_operands = 0 : i64, tpu.core_type = #tpu.core_type<tc>, window_params = [{transform_indices = @transform_0, window_bounds = array<i64: 2, 8, 32>}, {transform_indices = @transform_1, window_bounds = array<i64: 2, 8>}, {pipeline_mode = #tpu.pipeline_mode<synchronous>, transform_indices = @transform_2, window_bounds = array<i64: 1, 32>}, {pipeline_mode = #tpu.pipeline_mode<synchronous>, transform_indices = @transform_3, window_bounds = array<i64: 32, 128>}, {pipeline_mode = #tpu.pipeline_mode<synchronous>, transform_indices = @transform_4, window_bounds = array<i64: 1, 128>}, {pipeline_mode = #tpu.pipeline_mode<synchronous>, transform_indices = @transform_5, window_bounds = array<i64: 128, 128>}, {pipeline_mode = #tpu.pipeline_mode<synchronous>, transform_indices = @transform_6, window_bounds = array<i64: 1, 128>}, {pipeline_mode = #tpu.pipeline_mode<synchronous>, transform_indices = @transform_7, window_bounds = array<i64: 128, 128>}, {pipeline_mode = #tpu.pipeline_mode<synchronous>, transform_indices = @transform_8, window_bounds = array<i64: 1, 128>}, {transform_indices = @transform_9, window_bounds = array<i64: 2, 128>}]} {
    %c0 = arith.constant 0 : index
    %c0_0 = arith.constant 0 : index
    %c0_1 = arith.constant 0 : index
    %0 = vector.load %arg1[%c0, %c0_0, %c0_1] : memref<2x8x32xf32, #tpu.memory_space<vmem>>, vector<2x8x32xf32>
    %c0_2 = arith.constant 0 : index
    %c0_3 = arith.constant 0 : index
    %1 = vector.load %arg2[%c0_2, %c0_3] : memref<2x8xf32, #tpu.memory_space<vmem>>, vector<2x8xf32>
    %c0_4 = arith.constant 0 : index
    %c0_5 = arith.constant 0 : index
    %2 = vector.load %arg3[%c0_4, %c0_5] : memref<1x32xf32, #tpu.memory_space<vmem>>, vector<1x32xf32>
    %3 = vector.shape_cast %2 : vector<1x32xf32> to vector<1x1x32xf32>
    %4 = vector.broadcast %3 : vector<1x1x32xf32> to vector<2x8x32xf32>
    %5 = arith.mulf %0, %4 : vector<2x8x32xf32>
    %cst = arith.constant dense<0.000000e+00> : vector<2x8xf32>
    %6 = vector.multi_reduction <add>, %5, %cst [2] : vector<2x8x32xf32> to vector<2x8xf32>
    %cst_6 = arith.constant 0.176776692 : f32
    %7 = vector.broadcast %cst_6 : f32 to vector<2x8xf32>
    %8 = arith.mulf %6, %7 : vector<2x8xf32>
    %cst_7 = arith.constant 5.000000e-01 : f32
    %9 = vector.broadcast %cst_7 : f32 to vector<2x8xf32>
    %10 = arith.cmpf ogt, %1, %9 : vector<2x8xf32>
    %cst_8 = arith.constant -1.000000e+09 : f32
    %11 = vector.broadcast %cst_8 : f32 to vector<2x8xf32>
    %12 = arith.select %10, %8, %11 : vector<2x8xi1>, vector<2x8xf32>
    %cst_9 = arith.constant dense<0xFF800000> : vector<2xf32>
    %13 = vector.multi_reduction <maximumf>, %12, %cst_9 [1] : vector<2x8xf32> to vector<2xf32>
    %14 = vector.shape_cast %13 : vector<2xf32> to vector<2x1xf32>
    %15 = vector.broadcast %14 : vector<2x1xf32> to vector<2x8xf32>
    %16 = arith.subf %12, %15 : vector<2x8xf32>
    %17 = math.exp %16 : vector<2x8xf32>
    %cst_10 = arith.constant dense<0.000000e+00> : vector<2xf32>
    %18 = vector.multi_reduction <add>, %17, %cst_10 [1] : vector<2x8xf32> to vector<2xf32>
    %19 = vector.shape_cast %18 : vector<2xf32> to vector<2x1xf32>
    %20 = tpu.reciprocal %19 {approx = true} : vector<2x1xf32> -> vector<2x1xf32>
    %21 = vector.broadcast %20 : vector<2x1xf32> to vector<2x8xf32>
    %22 = arith.mulf %17, %21 : vector<2x8xf32>
    %23 = vector.shape_cast %22 : vector<2x8xf32> to vector<2x8x1xf32>
    %24 = vector.broadcast %23 : vector<2x8x1xf32> to vector<2x8x32xf32>
    %25 = arith.mulf %24, %0 : vector<2x8x32xf32>
    %cst_11 = arith.constant dense<0.000000e+00> : vector<2x32xf32>
    %26 = vector.multi_reduction <add>, %25, %cst_11 [1] : vector<2x8x32xf32> to vector<2x32xf32>
    %c0_12 = arith.constant 0 : index
    %c0_13 = arith.constant 0 : index
    %27 = vector.load %arg4[%c0_12, %c0_13] : memref<32x128xf32, #tpu.memory_space<vmem>>, vector<32x128xf32>
    %cst_14 = arith.constant dense<0.000000e+00> : vector<2x128xf32>
    %28 = tpu.matmul %26, %27, %cst_14 {dimension_numbers = #tpu.dot_dimension_numbers<[1], [0], [0], [1], [0, 0, 1, 1], [], []>} : vector<2x32xf32>, vector<32x128xf32>, vector<2x128xf32> -> vector<2x128xf32>
    %c0_15 = arith.constant 0 : index
    %c0_16 = arith.constant 0 : index
    %29 = vector.load %arg5[%c0_15, %c0_16] : memref<1x128xf32, #tpu.memory_space<vmem>>, vector<1x128xf32>
    %30 = vector.broadcast %29 : vector<1x128xf32> to vector<2x128xf32>
    %31 = arith.addf %28, %30 : vector<2x128xf32>
    %c0_17 = arith.constant 0 : index
    %c0_18 = arith.constant 0 : index
    %32 = vector.load %arg6[%c0_17, %c0_18] : memref<128x128xf32, #tpu.memory_space<vmem>>, vector<128x128xf32>
    %cst_19 = arith.constant dense<0.000000e+00> : vector<2x128xf32>
    %33 = tpu.matmul %31, %32, %cst_19 {dimension_numbers = #tpu.dot_dimension_numbers<[1], [0], [0], [1], [0, 0, 1, 1], [], []>} : vector<2x128xf32>, vector<128x128xf32>, vector<2x128xf32> -> vector<2x128xf32>
    %c0_20 = arith.constant 0 : index
    %c0_21 = arith.constant 0 : index
    %34 = vector.load %arg7[%c0_20, %c0_21] : memref<1x128xf32, #tpu.memory_space<vmem>>, vector<1x128xf32>
    %35 = vector.broadcast %34 : vector<1x128xf32> to vector<2x128xf32>
    %36 = arith.addf %33, %35 : vector<2x128xf32>
    %cst_22 = arith.constant 0.000000e+00 : f32
    %37 = vector.broadcast %cst_22 : f32 to vector<2x128xf32>
    %38 = arith.maximumf %36, %37 : vector<2x128xf32>
    %c0_23 = arith.constant 0 : index
    %c0_24 = arith.constant 0 : index
    %39 = vector.load %arg8[%c0_23, %c0_24] : memref<128x128xf32, #tpu.memory_space<vmem>>, vector<128x128xf32>
    %cst_25 = arith.constant dense<0.000000e+00> : vector<2x128xf32>
    %40 = tpu.matmul %38, %39, %cst_25 {dimension_numbers = #tpu.dot_dimension_numbers<[1], [0], [0], [1], [0, 0, 1, 1], [], []>} : vector<2x128xf32>, vector<128x128xf32>, vector<2x128xf32> -> vector<2x128xf32>
    %c0_26 = arith.constant 0 : index
    %c0_27 = arith.constant 0 : index
    %41 = vector.load %arg9[%c0_26, %c0_27] : memref<1x128xf32, #tpu.memory_space<vmem>>, vector<1x128xf32>
    %42 = vector.broadcast %41 : vector<1x128xf32> to vector<2x128xf32>
    %43 = arith.addf %40, %42 : vector<2x128xf32>
    %c0_28 = arith.constant 0 : index
    %c0_29 = arith.constant 0 : index
    %44 = vector.load %arg10[%c0_28, %c0_29] : memref<2x128xf32, #tpu.memory_space<vmem>>, vector<2x128xf32>
    tpu.vector_store %arg10[%c0_28, %c0_29], %43 {strides = array<i32>} : memref<2x128xf32, #tpu.memory_space<vmem>>, vector<2x128xf32>,
    return
  }
  func.func @transform_0(%arg0: i32) -> (i32, i32, i32) {
    %c0_i32 = arith.constant 0 : i32
    %c0_i32_0 = arith.constant 0 : i32
    %c0_i32_1 = arith.constant 0 : i32
    return %arg0, %c0_i32, %c0_i32_0 : i32, i32, i32
  }
  func.func @transform_1(%arg0: i32) -> (i32, i32) {
    %c0_i32 = arith.constant 0 : i32
    %c0_i32_0 = arith.constant 0 : i32
    return %arg0, %c0_i32 : i32, i32
  }
  func.func @transform_2(%arg0: i32) -> (i32, i32) {
    %c0_i32 = arith.constant 0 : i32
    %c0_i32_0 = arith.constant 0 : i32
    %c0_i32_1 = arith.constant 0 : i32
    return %c0_i32, %c0_i32_0 : i32, i32
  }
  func.func @transform_3(%arg0: i32) -> (i32, i32) {
    %c0_i32 = arith.constant 0 : i32
    %c0_i32_0 = arith.constant 0 : i32
    %c0_i32_1 = arith.constant 0 : i32
    return %c0_i32, %c0_i32_0 : i32, i32
  }
  func.func @transform_4(%arg0: i32) -> (i32, i32) {
    %c0_i32 = arith.constant 0 : i32
    %c0_i32_0 = arith.constant 0 : i32
    %c0_i32_1 = arith.constant 0 : i32
    return %c0_i32, %c0_i32_0 : i32, i32
  }
  func.func @transform_5(%arg0: i32) -> (i32, i32) {
    %c0_i32 = arith.constant 0 : i32
    %c0_i32_0 = arith.constant 0 : i32
    %c0_i32_1 = arith.constant 0 : i32
    return %c0_i32, %c0_i32_0 : i32, i32
  }
  func.func @transform_6(%arg0: i32) -> (i32, i32) {
    %c0_i32 = arith.constant 0 : i32
    %c0_i32_0 = arith.constant 0 : i32
    %c0_i32_1 = arith.constant 0 : i32
    return %c0_i32, %c0_i32_0 : i32, i32
  }
  func.func @transform_7(%arg0: i32) -> (i32, i32) {
    %c0_i32 = arith.constant 0 : i32
    %c0_i32_0 = arith.constant 0 : i32
    %c0_i32_1 = arith.constant 0 : i32
    return %c0_i32, %c0_i32_0 : i32, i32
  }
  func.func @transform_8(%arg0: i32) -> (i32, i32) {
    %c0_i32 = arith.constant 0 : i32
    %c0_i32_0 = arith.constant 0 : i32
    %c0_i32_1 = arith.constant 0 : i32
    return %c0_i32, %c0_i32_0 : i32, i32
  }
  func.func @transform_9(%arg0: i32) -> (i32, i32) {
    %c0_i32 = arith.constant 0 : i32
    %c0_i32_0 = arith.constant 0 : i32
    return %arg0, %c0_i32 : i32, i32
  }
}

</mosaic_0001>

<llo_original>
// kernel: tpu_custom_call.1
$region0: #{tpu_custom_call.1}
  #allocation0 [shape = 'u32[]', space=smem, size = 0x4, offset = 0x4, fixed_abs, tag = 'smem constant byte address 0x4 - core index']
  #allocation1 [shape = 'u32[144,128]{1,0:T(1,128)}', space=vmem, size = 0x12000, scoped, tag = 'internal scratch']
  %s0 = inlined_call_operand.hbm [shape: f32[2,8,32], index: 0, kind: input, shape index: {}]
  %s1 = inlined_call_operand.vmem [shape: f32[2,8], index: 1, kind: input, shape index: {}]
  %s2 = inlined_call_operand.vmem [shape: f32[1,32], index: 2, kind: input, shape index: {}]
  %s3 = inlined_call_operand.hbm [shape: f32[32,128], index: 3, kind: input, shape index: {}]
  %s4 = inlined_call_operand.vmem [shape: f32[1,128], index: 4, kind: input, shape index: {}]
  %s5 = inlined_call_operand.hbm [shape: f32[128,128], index: 5, kind: input, shape index: {}]
  %s6 = inlined_call_operand.vmem [shape: f32[1,128], index: 6, kind: input, shape index: {}]
  %s7 = inlined_call_operand.hbm [shape: f32[128,128], index: 7, kind: input, shape index: {}]
  %s8 = inlined_call_operand.vmem [shape: f32[1,128], index: 8, kind: input, shape index: {}]
  %s9 = inlined_call_operand.hbm [shape: f32[2,128], index: 9, kind: output, shape index: {}]
  %s10 = sld [smem:[#allocation0]]
  $region62: #{tpu_custom_call.1} parent=0
    _
  %s12 = ssub.s32 1, %s10
  %s13 = scalar_select 0, %s12, %s10
  $region1: #{tpu_custom_call.1} parent=0
    #allocation2 [shape = 'u8[8192]{0}', space=vmem, size = 0x2000, scoped, tag = 'input window, operand 0, single buffered']
    #allocation3 [shape = 's32[1]{0}', space=sflag, size = 0x4, scoped, tag = 'scoped memory for tpu_custom_call.1']
    #allocation4 [shape = 's32[1]{0}', space=sflag, size = 0x4, scoped, tag = 'scoped memory for tpu_custom_call.1']
    #allocation5 [shape = 'u8[16384]{0}', space=vmem, size = 0x4000, scoped, tag = 'input window, operand 3, single buffered']
    #allocation6 [shape = 's32[1]{0}', space=sflag, size = 0x4, scoped, tag = 'scoped memory for tpu_custom_call.1']
    #allocation7 [shape = 'u8[65536]{0}', space=vmem, size = 0x10000, scoped, tag = 'input window, operand 5, single buffered']
    #allocation8 [shape = 'u8[65536]{0}', space=vmem, size = 0x10000, scoped, tag = 'input window, operand 7, single buffered']
    #allocation9 [shape = 's32[1]{0}', space=sflag, size = 0x4, scoped, tag = 'scoped memory for tpu_custom_call.1']
    #allocation10 [shape = 'u8[1024]{0}', space=vmem, size = 0x400, scoped, tag = 'output window, operand 0, single buffered']
    %14 = vsyncpa [#allocation3], 0
    %15 = vsyncpa [#allocation6], 0
    %16 = vsyncpa [#allocation9], 0
    %17 = vsyncpa [#allocation4], 0
    // Predicated region
    $region2: #{tpu_custom_call.1} parent=1 // pred_check
      _
    $region3: #{tpu_custom_call.1} parent=1 // pred_check_branch
      %19 = sbr.rel (0) target = $region5
    $region4: #{tpu_custom_call.1} parent=1 // pred_region
      %s21 = ssub.s32 256, 256
      %22 = vsyncadd [#allocation3], %s21
      %s23 = sshll.u32 [#allocation2], 4
      %s24 = int_to_ptr.vmem [resolvable:$true] %s23
      %29 = dma.hbm_to_vmem [thread:$0]  %s0, 256, %s24, [#allocation3], 128, 128, 8
    $region5: #{tpu_custom_call.1} parent=1 // pred_fallthru
      _
    // Predicated region
    $region6: #{tpu_custom_call.1} parent=1 // pred_check
      _
    $region7: #{tpu_custom_call.1} parent=1 // pred_check_branch
      %31 = sbr.rel (0) target = $region9
    $region8: #{tpu_custom_call.1} parent=1 // pred_region
      _
    $region9: #{tpu_custom_call.1} parent=1 // pred_fallthru
      _
    // Predicated region
    $region10: #{tpu_custom_call.1} parent=1 // pred_check
      _
    $region11: #{tpu_custom_call.1} parent=1 // pred_check_branch
      %33 = sbr.rel (0) target = $region13
    $region12: #{tpu_custom_call.1} parent=1 // pred_region
      _
    $region13: #{tpu_custom_call.1} parent=1 // pred_fallthru
      _
    // Predicated region
    $region14: #{tpu_custom_call.1} parent=1 // pred_check
      _
    $region15: #{tpu_custom_call.1} parent=1 // pred_check_branch
      %35 = sbr.rel (0) target = $region17
    $region16: #{tpu_custom_call.1} parent=1 // pred_region
      %s37 = ssub.s32 512, 512
      %38 = vsyncadd [#allocation6], %s37
      %s39 = sshll.u32 [#allocation5], 4
      %s40 = int_to_ptr.vmem [resolvable:$true] %s39
      %45 = dma.hbm_to_vmem [thread:$0]  %s3, 512, %s40, [#allocation6], 128, 128, 8
    $region17: #{tpu_custom_call.1} parent=1 // pred_fallthru
      _
    // Predicated region
    $region18: #{tpu_custom_call.1} parent=1 // pred_check
      _
    $region19: #{tpu_custom_call.1} parent=1 // pred_check_branch
      %47 = sbr.rel (0) target = $region21
    $region20: #{tpu_custom_call.1} parent=1 // pred_region
      _
    $region21: #{tpu_custom_call.1} parent=1 // pred_fallthru
      _
    // Predicated region
    $region22: #{tpu_custom_call.1} parent=1 // pred_check
      _
    $region23: #{tpu_custom_call.1} parent=1 // pred_check_branch
      %49 = sbr.rel (0) target = $region25
    $region24: #{tpu_custom_call.1} parent=1 // pred_region
      %s51 = ssub.s32 2048, 2048
      %52 = vsyncadd [#allocation6], %s51
      %s53 = sshll.u32 [#allocation7], 4
      %s54 = int_to_ptr.vmem [resolvable:$true] %s53
      %59 = dma.hbm_to_vmem [thread:$0]  %s5, 2048, %s54, [#allocation6], 128, 128, 8
    $region25: #{tpu_custom_call.1} parent=1 // pred_fallthru
      _
    // Predicated region
    $region26: #{tpu_custom_call.1} parent=1 // pred_check
      _
    $region27: #{tpu_custom_call.1} parent=1 // pred_check_branch
      %61 = sbr.rel (0) target = $region29
    $region28: #{tpu_custom_call.1} parent=1 // pred_region
      _
    $region29: #{tpu_custom_call.1} parent=1 // pred_fallthru
      _
    // Predicated region
    $region30: #{tpu_custom_call.1} parent=1 // pred_check
      _
    $region31: #{tpu_custom_call.1} parent=1 // pred_check_branch
      %63 = sbr.rel (0) target = $region33
    $region32: #{tpu_custom_call.1} parent=1 // pred_region
      %s65 = ssub.s32 2048, 2048
      %66 = vsyncadd [#allocation9], %s65
      %s67 = sshll.u32 [#allocation8], 4
      %s68 = int_to_ptr.vmem [resolvable:$true] %s67
      %73 = dma.hbm_to_vmem [thread:$0]  %s7, 2048, %s68, [#allocation9], 128, 128, 8
    $region33: #{tpu_custom_call.1} parent=1 // pred_fallthru
      _
    // Predicated region
    $region34: #{tpu_custom_call.1} parent=1 // pred_check
      _
    $region35: #{tpu_custom_call.1} parent=1 // pred_check_branch
      %75 = sbr.rel (0) target = $region37
    $region36: #{tpu_custom_call.1} parent=1 // pred_region
      _
    $region37: #{tpu_custom_call.1} parent=1 // pred_fallthru
      _
    // Predicated region
    $region38: #{tpu_custom_call.1} parent=1 // pred_check
      _
    $region39: #{tpu_custom_call.1} parent=1 // pred_check_branch
      %77 = sbr.rel (0) target = $region41
    $region40: #{tpu_custom_call.1} parent=1 // pred_region
      %78 = dma.done [#allocation3], 256
    $region41: #{tpu_custom_call.1} parent=1 // pred_fallthru
      _
    // Predicated region
    $region42: #{tpu_custom_call.1} parent=1 // pred_check
      _
    $region43: #{tpu_custom_call.1} parent=1 // pred_check_branch
      %80 = sbr.rel (0) target = $region45
    $region44: #{tpu_custom_call.1} parent=1 // pred_region
      %81 = dma.done [#allocation6], 512
    $region45: #{tpu_custom_call.1} parent=1 // pred_fallthru
      _
    // Predicated region
    $region46: #{tpu_custom_call.1} parent=1 // pred_check
      _
    $region47: #{tpu_custom_call.1} parent=1 // pred_check_branch
      %83 = sbr.rel (0) target = $region49
    $region48: #{tpu_custom_call.1} parent=1 // pred_region
      %84 = dma.done [#allocation6], 2048
    $region49: #{tpu_custom_call.1} parent=1 // pred_fallthru
      _
    // Predicated region
    $region50: #{tpu_custom_call.1} parent=1 // pred_check
      _
    $region51: #{tpu_custom_call.1} parent=1 // pred_check_branch
      %86 = sbr.rel (0) target = $region53
    $region52: #{tpu_custom_call.1} parent=1 // pred_region
      %87 = dma.done [#allocation9], 2048
    $region53: #{tpu_custom_call.1} parent=1 // pred_fallthru
      _
    %v88 = vld [vmem:[#allocation2] sm:$0xff]
    %v89 = vld [vmem:[#allocation2 + $0x8] sm:$0xff]
    %v90 = vld [vmem:[%s1] sm:$0x3]
    %v91 = vld [vmem:[%s2] sm:$0x1]
    %v93 = vlaneseq
    %v94 = vshrl.u32 %v93, 7
    %v95 = vsub.s32 0, %v94
    %v96 = vrot.slane %v91, %v95
    %v98 = vmul.f32 %v88, %v96
    %v99 = vmul.f32 %v89, %v96
    %vm100 = vcmask 261120
    %v101 = vsel %vm100, %v98, 0.0
    %102 = vadd.xlane.f32.xlu0 %v101
    %v103 = vpop.xlane.xlu0 %102
    %v104 = vsel %vm100, %v99, 0.0
    %105 = vadd.xlane.f32.xlu0 %v104
    %v106 = vpop.xlane.xlu0 %105
    %v107 = vmul.f32 %v103, 0.17677669
    %v108 = vmul.f32 %v106, 0.17677669
    %vm109 = vcmp.gt.f32.partialorder %v90, 0.5
    %v112 = vlaneseq
    %v113 = vand.u32 %v112, 127
    %v114 = vlaneseq
    %v115 = vshrl.u32 %v114, 7
    %v116 = vsub.s32 %v113, %v115
    %v117 = vrot.slane %v107, %v116
    %v118 = vlaneseq
    %v119 = vshrl.u32 %v118, 7
    %v120 = vsub.s32 %v113, %v119
    %v121 = vrot.slane %v108, %v120
    %vm122 = vcmask 1041409
    %v123 = vsel %vm122, %v121, %v117
    %v125 = vsel %vm109, %v123, -1e+09
    %vm126 = vcmask 58368
    %v127 = vsel %vm126, %v125, -inf
    %128 = vmax.xlane.f32.xlu0 %v127
    %v129 = vpop.xlane.xlu0 %128
    %v130 = vsub.f32 %v125, %v129
    %v131 = vmul.f32 %v130, 1.442695
    %v132 = vpow.pop %v131
    %v133 = vsel %vm126, %v132, 0.0
    %134 = vadd.xlane.f32.xlu0 %v133
    %v135 = vpop.xlane.xlu0 %134
    %v136 = vrcp.pop %v135
    %v137 = vmul.f32 %v132, %v136
    %v138 = vlaneseq
    %v139 = vshrl.u32 %v138, 7
    %v140 = vsub.s32 0, %v139
    %v141 = vrot.slane %v137, %v140
    %143 = vbcast.lane.b32.xlu0 %v141, 256
    %v144 = vpop.permute.xlu0 %143
    %v145 = vlaneseq
    %v146 = vshrl.u32 %v145, 7
    %v147 = vsub.s32 1, %v146
    %v148 = vrot.slane %v137, %v147
    %150 = vbcast.lane.b32.xlu0 %v148, 256
    %v151 = vpop.permute.xlu0 %150
    %v152 = vmul.f32 %v144, %v88
    %v153 = vmul.f32 %v151, %v89
    %v154 = vsel %vm100, %v152, 0.0
    %v155 = vrot.slane %v154, 4
    %v156 = vadd.f32 %v154, %v155
    %v157 = vrot.slane %v156, 2
    %v158 = vadd.f32 %v156, %v157
    %v159 = vrot.slane %v158, 1
    %v160 = vadd.f32 %v158, %v159
    %v161 = vsel %vm100, %v153, 0.0
    %v162 = vrot.slane %v161, 4
    %v163 = vadd.f32 %v161, %v162
    %v164 = vrot.slane %v163, 2
    %v165 = vadd.f32 %v163, %v164
    %v166 = vrot.slane %v165, 1
    %v167 = vadd.f32 %v165, %v166
    %v168 = vld [vmem:[#allocation5] sm:$0xff]
    %v169 = vld [vmem:[#allocation5 + $0x8] sm:$0xff]
    %v170 = vld [vmem:[#allocation5 + $0x10] sm:$0xff]
    %v171 = vld [vmem:[#allocation5 + $0x18] sm:$0xff]
    %v172 = vld [vmem:[%s4] sm:$0x1]
    %v174 = vlaneseq
    %v175 = vshrl.u32 %v174, 7
    %v176 = vsub.s32 0, %v175
    %v177 = vrot.slane %v172, %v176
    %v181 = vsel %vm122, %v167, %v160
    %v182 = vsel %vm100, %v181, 0
    %184 = vmatprep.subr.mxu0 0.0
    %185 = vmatpush1.msra.mxu0 %v168
    %186 = vmatprep.subr.mxu0 0.0
    %187 = vmatpush1.msra.mxu0 %v169
    %188 = vmatprep.subr.mxu0 0.0
    %189 = vmatpush1.msra.mxu0 %v170
    %190 = vmatprep.subr.mxu0 0.0
    %191 = vmatpush1.msra.mxu0 %v171
    %192 = vmatprep.subr.mxu0 0.0
    %193 = vmatpush1.msra.mxu0 0.0
    %194 = vmatprep.subr.mxu0 0.0
    %195 = vmatpush1.msra.mxu0 0.0
    %196 = vmatprep.subr.mxu0 0.0
    %197 = vmatpush1.msra.mxu0 0.0
    %198 = vmatprep.subr.mxu0 0.0
    %199 = vmatpush1.msra.mxu0 0.0
    %200 = vmatprep.subr.mxu0 0.0
    %201 = vmatpush1.msra.mxu0 0.0
    %202 = vmatprep.subr.mxu0 0.0
    %203 = vmatpush1.msra.mxu0 0.0
    %204 = vmatprep.subr.mxu0 0.0
    %205 = vmatpush1.msra.mxu0 0.0
    %206 = vmatprep.subr.mxu0 0.0
    %207 = vmatpush1.msra.mxu0 0.0
    %208 = vmatprep.subr.mxu0 0.0
    %209 = vmatpush1.msra.mxu0 0.0
    %210 = vmatprep.subr.mxu0 0.0
    %211 = vmatpush1.msra.mxu0 0.0
    %212 = vmatprep.subr.mxu0 0.0
    %213 = vmatpush1.msra.mxu0 0.0
    %214 = vmatprep.subr.mxu0 0.0
    %215 = vmatpush1.msra.mxu0 0.0
    %216 = vmatprep.subr.mxu0 0.0
    %217 = vmatpush1.msra.mxu0 0.0
    %218 = vmatprep.subr.mxu0 0.0
    %219 = vmatpush1.msra.mxu0 0.0
    %220 = vmatprep.subr.mxu0 0.0
    %221 = vmatpush1.msra.mxu0 0.0
    %222 = vmatprep.subr.mxu0 0.0
    %223 = vmatpush1.msra.mxu0 0.0
    %224 = vmatprep.subr.mxu0 0.0
    %225 = vmatpush1.msra.mxu0 0.0
    %226 = vmatprep.subr.mxu0 0.0
    %227 = vmatpush1.msra.mxu0 0.0
    %228 = vmatprep.subr.mxu0 0.0
    %229 = vmatpush1.msra.mxu0 0.0
    %230 = vmatprep.subr.mxu0 0.0
    %231 = vmatpush1.msra.mxu0 0.0
    %232 = vmatprep.subr.mxu0 0.0
    %233 = vmatpush1.msra.mxu0 0.0
    %234 = vmatprep.subr.mxu0 0.0
    %235 = vmatpush1.msra.mxu0 0.0
    %236 = vmatprep.subr.mxu0 0.0
    %237 = vmatpush1.msra.mxu0 0.0
    %238 = vmatprep.subr.mxu0 0.0
    %239 = vmatpush1.msra.mxu0 0.0
    %240 = vmatprep.subr.mxu0 0.0
    %241 = vmatpush1.msra.mxu0 0.0
    %242 = vmatprep.subr.mxu0 0.0
    %243 = vmatpush1.msra.mxu0 0.0
    %244 = vmatprep.subr.mxu0 0.0
    %245 = vmatpush1.msra.mxu0 0.0
    %246 = vmatprep.subr.mxu0 0.0
    %247 = vmatpush1.msra.mxu0 0.0
    %248 = vmatprep.mubr.f32.mxu0 0.0
    %249 = vmatmul.mubr.f32.gmra.mrb[0].mxu0 %v182
    %v250 = vpop.f32.mrb[0].mxu0
    %v251 = vadd.f32 %v177, %v250
    %v252 = vpop.f32.mrb[0].mxu0
    %253 = vdwg.mxu0
    %v254 = vld [vmem:[#allocation7] sm:$0xff]
    %v255 = vld [vmem:[#allocation7 + $0x8] sm:$0xff]
    %v256 = vld [vmem:[#allocation7 + $0x10] sm:$0xff]
    %v257 = vld [vmem:[#allocation7 + $0x18] sm:$0xff]
    %v258 = vld [vmem:[#allocation7 + $0x20] sm:$0xff]
    %v259 = vld [vmem:[#allocation7 + $0x28] sm:$0xff]
    %v260 = vld [vmem:[#allocation7 + $0x30] sm:$0xff]
    %v261 = vld [vmem:[#allocation7 + $0x38] sm:$0xff]
    %v262 = vld [vmem:[#allocation7 + $0x40] sm:$0xff]
    %v263 = vld [vmem:[#allocation7 + $0x48] sm:$0xff]
    %v264 = vld [vmem:[#allocation7 + $0x50] sm:$0xff]
    %v265 = vld [vmem:[#allocation7 + $0x58] sm:$0xff]
    %v266 = vld [vmem:[#allocation7 + $0x60] sm:$0xff]
    %v267 = vld [vmem:[#allocation7 + $0x68] sm:$0xff]
    %v268 = vld [vmem:[#allocation7 + $0x70] sm:$0xff]
    %v269 = vld [vmem:[#allocation7 + $0x78] sm:$0xff]
    %v270 = vld [vmem:[%s6] sm:$0x1]
    %v272 = vlaneseq
    %v273 = vshrl.u32 %v272, 7
    %v274 = vsub.s32 0, %v273
    %v275 = vrot.slane %v270, %v274
    %277 = vmatprep.subr.mxu0 0.0
    %278 = vmatpush1.msra.mxu0 %v254
    %279 = vmatprep.subr.mxu0 0.0
    %280 = vmatpush1.msra.mxu0 %v255
    %281 = vmatprep.subr.mxu0 0.0
    %282 = vmatpush1.msra.mxu0 %v256
    %283 = vmatprep.subr.mxu0 0.0
    %284 = vmatpush1.msra.mxu0 %v257
    %285 = vmatprep.subr.mxu0 0.0
    %286 = vmatpush1.msra.mxu0 %v258
    %287 = vmatprep.subr.mxu0 0.0
    %288 = vmatpush1.msra.mxu0 %v259
    %289 = vmatprep.subr.mxu0 0.0
    %290 = vmatpush1.msra.mxu0 %v260
    %291 = vmatprep.subr.mxu0 0.0
    %292 = vmatpush1.msra.mxu0 %v261
    %293 = vmatprep.subr.mxu0 0.0
    %294 = vmatpush1.msra.mxu0 %v262
    %295 = vmatprep.subr.mxu0 0.0
    %296 = vmatpush1.msra.mxu0 %v263
    %297 = vmatprep.subr.mxu0 0.0
    %298 = vmatpush1.msra.mxu0 %v264
    %299 = vmatprep.subr.mxu0 0.0
    %300 = vmatpush1.msra.mxu0 %v265
    %301 = vmatprep.subr.mxu0 0.0
    %302 = vmatpush1.msra.mxu0 %v266
    %303 = vmatprep.subr.mxu0 0.0
    %304 = vmatpush1.msra.mxu0 %v267
    %305 = vmatprep.subr.mxu0 0.0
    %306 = vmatpush1.msra.mxu0 %v268
    %307 = vmatprep.subr.mxu0 0.0
    %308 = vmatpush1.msra.mxu0 %v269
    %309 = vmatprep.subr.mxu0 0.0
    %310 = vmatpush1.msra.mxu0 0.0
    %311 = vmatprep.subr.mxu0 0.0
    %312 = vmatpush1.msra.mxu0 0.0
    %313 = vmatprep.subr.mxu0 0.0
    %314 = vmatpush1.msra.mxu0 0.0
    %315 = vmatprep.subr.mxu0 0.0
    %316 = vmatpush1.msra.mxu0 0.0
    %317 = vmatprep.subr.mxu0 0.0
    %318 = vmatpush1.msra.mxu0 0.0
    %319 = vmatprep.subr.mxu0 0.0
    %320 = vmatpush1.msra.mxu0 0.0
    %321 = vmatprep.subr.mxu0 0.0
    %322 = vmatpush1.msra.mxu0 0.0
    %323 = vmatprep.subr.mxu0 0.0
    %324 = vmatpush1.msra.mxu0 0.0
    %325 = vmatprep.subr.mxu0 0.0
    %326 = vmatpush1.msra.mxu0 0.0
    %327 = vmatprep.subr.mxu0 0.0
    %328 = vmatpush1.msra.mxu0 0.0
    %329 = vmatprep.subr.mxu0 0.0
    %330 = vmatpush1.msra.mxu0 0.0
    %331 = vmatprep.subr.mxu0 0.0
    %332 = vmatpush1.msra.mxu0 0.0
    %333 = vmatprep.subr.mxu0 0.0
    %334 = vmatpush1.msra.mxu0 0.0
    %335 = vmatprep.subr.mxu0 0.0
    %336 = vmatpush1.msra.mxu0 0.0
    %337 = vmatprep.subr.mxu0 0.0
    %338 = vmatpush1.msra.mxu0 0.0
    %339 = vmatprep.subr.mxu0 0.0
    %340 = vmatpush1.msra.mxu0 0.0
    %341 = vmatprep.mubr.f32.mxu0 0.0
    %342 = vmatmul.mubr.f32.gmra.mrb[0].mxu0 %v251
    %v343 = vpop.f32.mrb[0].mxu0
    %v344 = vadd.f32 %v275, %v343
    %v345 = vpop.f32.mrb[0].mxu0
    %346 = vdwg.mxu0
    %v347 = vmax.f32 %v344, 0.0
    %v348 = vld [vmem:[#allocation8] sm:$0xff]
    %v349 = vld [vmem:[#allocation8 + $0x8] sm:$0xff]
    %v350 = vld [vmem:[#allocation8 + $0x10] sm:$0xff]
    %v351 = vld [vmem:[#allocation8 + $0x18] sm:$0xff]
    %v352 = vld [vmem:[#allocation8 + $0x20] sm:$0xff]
    %v353 = vld [vmem:[#allocation8 + $0x28] sm:$0xff]
    %v354 = vld [vmem:[#allocation8 + $0x30] sm:$0xff]
    %v355 = vld [vmem:[#allocation8 + $0x38] sm:$0xff]
    %v356 = vld [vmem:[#allocation8 + $0x40] sm:$0xff]
    %v357 = vld [vmem:[#allocation8 + $0x48] sm:$0xff]
    %v358 = vld [vmem:[#allocation8 + $0x50] sm:$0xff]
    %v359 = vld [vmem:[#allocation8 + $0x58] sm:$0xff]
    %v360 = vld [vmem:[#allocation8 + $0x60] sm:$0xff]
    %v361 = vld [vmem:[#allocation8 + $0x68] sm:$0xff]
    %v362 = vld [vmem:[#allocation8 + $0x70] sm:$0xff]
    %v363 = vld [vmem:[#allocation8 + $0x78] sm:$0xff]
    %v364 = vld [vmem:[%s8] sm:$0x1]
    %v366 = vlaneseq
    %v367 = vshrl.u32 %v366, 7
    %v368 = vsub.s32 0, %v367
    %v369 = vrot.slane %v364, %v368
    %371 = vmatprep.subr.mxu0 0.0
    %372 = vmatpush1.msra.mxu0 %v348
    %373 = vmatprep.subr.mxu0 0.0
    %374 = vmatpush1.msra.mxu0 %v349
    %375 = vmatprep.subr.mxu0 0.0
    %376 = vmatpush1.msra.mxu0 %v350
    %377 = vmatprep.subr.mxu0 0.0
    %378 = vmatpush1.msra.mxu0 %v351
    %379 = vmatprep.subr.mxu0 0.0
    %380 = vmatpush1.msra.mxu0 %v352
    %381 = vmatprep.subr.mxu0 0.0
    %382 = vmatpush1.msra.mxu0 %v353
    %383 = vmatprep.subr.mxu0 0.0
    %384 = vmatpush1.msra.mxu0 %v354
    %385 = vmatprep.subr.mxu0 0.0
    %386 = vmatpush1.msra.mxu0 %v355
    %387 = vmatprep.subr.mxu0 0.0
    %388 = vmatpush1.msra.mxu0 %v356
    %389 = vmatprep.subr.mxu0 0.0
    %390 = vmatpush1.msra.mxu0 %v357
    %391 = vmatprep.subr.mxu0 0.0
    %392 = vmatpush1.msra.mxu0 %v358
    %393 = vmatprep.subr.mxu0 0.0
    %394 = vmatpush1.msra.mxu0 %v359
    %395 = vmatprep.subr.mxu0 0.0
    %396 = vmatpush1.msra.mxu0 %v360
    %397 = vmatprep.subr.mxu0 0.0
    %398 = vmatpush1.msra.mxu0 %v361
    %399 = vmatprep.subr.mxu0 0.0
    %400 = vmatpush1.msra.mxu0 %v362
    %401 = vmatprep.subr.mxu0 0.0
    %402 = vmatpush1.msra.mxu0 %v363
    %403 = vmatprep.subr.mxu0 0.0
    %404 = vmatpush1.msra.mxu0 0.0
    %405 = vmatprep.subr.mxu0 0.0
    %406 = vmatpush1.msra.mxu0 0.0
    %407 = vmatprep.subr.mxu0 0.0
    %408 = vmatpush1.msra.mxu0 0.0
    %409 = vmatprep.subr.mxu0 0.0
    %410 = vmatpush1.msra.mxu0 0.0
    %411 = vmatprep.subr.mxu0 0.0
    %412 = vmatpush1.msra.mxu0 0.0
    %413 = vmatprep.subr.mxu0 0.0
    %414 = vmatpush1.msra.mxu0 0.0
    %415 = vmatprep.subr.mxu0 0.0
    %416 = vmatpush1.msra.mxu0 0.0
    %417 = vmatprep.subr.mxu0 0.0
    %418 = vmatpush1.msra.mxu0 0.0
    %419 = vmatprep.subr.mxu0 0.0
    %420 = vmatpush1.msra.mxu0 0.0
    %421 = vmatprep.subr.mxu0 0.0
    %422 = vmatpush1.msra.mxu0 0.0
    %423 = vmatprep.subr.mxu0 0.0
    %424 = vmatpush1.msra.mxu0 0.0
    %425 = vmatprep.subr.mxu0 0.0
    %426 = vmatpush1.msra.mxu0 0.0
    %427 = vmatprep.subr.mxu0 0.0
    %428 = vmatpush1.msra.mxu0 0.0
    %429 = vmatprep.subr.mxu0 0.0
    %430 = vmatpush1.msra.mxu0 0.0
    %431 = vmatprep.subr.mxu0 0.0
    %432 = vmatpush1.msra.mxu0 0.0
    %433 = vmatprep.subr.mxu0 0.0
    %434 = vmatpush1.msra.mxu0 0.0
    %435 = vmatprep.mubr.f32.mxu0 0.0
    %436 = vmatmul.mubr.f32.gmra.mrb[0].mxu0 %v347
    %v437 = vpop.f32.mrb[0].mxu0
    %v438 = vadd.f32 %v369, %v437
    %v439 = vpop.f32.mrb[0].mxu0
    %440 = vdwg.mxu0
    %441 = vst [vmem:[#allocation10] sm:$0x3] %v438
    // Predicated region
    $region54: #{tpu_custom_call.1} parent=1 // pred_check
      _
    $region55: #{tpu_custom_call.1} parent=1 // pred_check_branch
      %443 = sbr.rel (0) target = $region57
    $region56: #{tpu_custom_call.1} parent=1 // pred_region
      %s445 = ssub.s32 32, 32
      %446 = vsyncadd [#allocation4], %s445
      %s448 = sshll.u32 [#allocation10], 4
      %s449 = int_to_ptr.vmem [resolvable:$true] %s448
      %451 = dma.vmem_to_hbm [thread:$0]  %s449, 32, %s9, [#allocation4]
    $region57: #{tpu_custom_call.1} parent=1 // pred_fallthru
      _
    // Predicated region
    $region58: #{tpu_custom_call.1} parent=1 // pred_check
      _
    $region59: #{tpu_custom_call.1} parent=1 // pred_check_branch
      %453 = sbr.rel (0) target = $region61
    $region60: #{tpu_custom_call.1} parent=1 // pred_region
      %454 = dma.done [#allocation4], 32
    $region61: #{tpu_custom_call.1} parent=1 // pred_fallthru
      _
    %455 = vsyncpa [#allocation3], 1
    %456 = vsyncpa [#allocation6], 1
    %457 = vsyncpa [#allocation9], 1
    %458 = vsyncpa [#allocation4], 1

</llo_original>
